<compile_context>
chip_gen: v7x
topology: tpu7x:2x2x1
jax: 0.10.0
libtpu: 0.0.40
codegen_flags: <defaults>
</compile_context>

<pallas_src>
import jax
import jax.numpy as jnp
from jax import lax
from jax.experimental import pallas as pl
from jax.experimental.pallas import tpu as pltpu


def _atc_partials_kernel(temp_ref, audio_ref, trows_ref, text_t_ref,
                         cmax_ref, csum_ref, rlse_ref, diag_ref,
                         absa_ref, sqa_ref, abst_ref, sqt_ref):
    """One row tile: (tm, B) similarity block + per-tile partial reductions."""
    scale = jnp.exp(temp_ref[0])                       # parameter stores log(1/temperature)

    a = audio_ref[...]                                  # (tm, D), input dtype
    tr = trows_ref[...]                                 # (tm, D), matching text rows
    tT = text_t_ref[...]                                # (D, B), MXU dtype, resident block

    # ---- similarity tile on the MXU: (tm, D) @ (D, B) -> (tm, B), f32 accumulation ----
    if tT.dtype == jnp.float32:
        # Exact path: full-precision f32 logits.
        sim = scale * jnp.dot(a.astype(jnp.float32), tT,
                              preferred_element_type=jnp.float32,
                              precision=lax.Precision.HIGHEST)
    else:
        # Fast path: low-precision operands straight to the MXU, scale the f32 logits.
        sim = scale * jnp.dot(a.astype(tT.dtype), tT,
                              preferred_element_type=jnp.float32)

    # ---- diagonal (trace) entries: exact f32 row-wise VPU dot, no eye/iota/gather ----
    a_f = a.astype(jnp.float32)
    tr_f = tr.astype(jnp.float32)
    diag = scale * jnp.sum(a_f * tr_f, axis=1, keepdims=True)          # (tm, 1)

    # ---- row logsumexp (audio -> text direction) ----
    rmax = jnp.max(sim, axis=1, keepdims=True)                         # (tm, 1)
    rlse = rmax + jnp.log(jnp.sum(jnp.exp(sim - rmax), axis=1, keepdims=True))

    # ---- per-tile column partials (text -> audio); merged across tiles in JAX ----
    # TODO(synk): single-exp fast path when logits are provably bounded (normalized embeds).
    cmax = jnp.max(sim, axis=0, keepdims=True)                         # (1, B)
    csum = jnp.sum(jnp.exp(sim - cmax), axis=0, keepdims=True)         # (1, B)

    def _sum_all(x):
        return jnp.sum(x, keepdims=True).reshape(1, 1, 1)

    cmax_ref[...] = cmax.reshape(cmax_ref.shape)
    csum_ref[...] = csum.reshape(csum_ref.shape)
    rlse_ref[...] = _sum_all(rlse)
    diag_ref[...] = _sum_all(diag)
    # Regularization sums fused into the same pass over the already-resident tiles.
    absa_ref[...] = _sum_all(jnp.abs(a_f))
    sqa_ref[...] = _sum_all(a_f * a_f)
    abst_ref[...] = _sum_all(jnp.abs(tr_f))
    sqt_ref[...] = _sum_all(tr_f * tr_f)


def audio_text_contrastive_loss(audio_embed, text_embed, log_inv_temp,
                                block_rows=None, mxu_dtype=jnp.bfloat16):
    """Forward of AudioTextContrastiveLoss (embed_regularization=True).

    audio_embed, text_embed: (B, D).  log_inv_temp: scalar = log(1 / temperature).
    mxu_dtype: operand dtype for the similarity matmul (bf16 fast path by default;
               pass jnp.float32 for exact logits).
    """
    B, D = audio_embed.shape
    assert text_embed.shape == (B, D)

    if block_rows is None:
        # Largest MXU-friendly row tile (multiples of 256 preferred; 512 fits easily in
        # v6e's 128 MiB VMEM) whose (tm, B) f32 temporaries stay bounded; small / odd
        # batches fall back to a single full-batch tile.
        block_rows = next((tm for tm in (512, 256, 128)
                           if B % tm == 0 and tm * B * 4 <= (8 << 20)), B)
    assert B % block_rows == 0
    n_tiles = B // block_rows

    temp = jnp.asarray(log_inv_temp, jnp.float32).reshape((1,))
    # One-time transposed/cast copy so the MXU sees a plain (tm, D) @ (D, B) matmul with no
    # per-grid-step relayout of the resident text block.
    text_t = text_embed.astype(mxu_dtype).T                             # (D, B)

    # Explicit scoped-VMEM budget: resident text^T (single-buffered) + double-buffered
    # audio / text-row tiles + ~3 live (tm, B) f32 sim/exp temporaries + (1, B) partials.
    a_bytes = jnp.dtype(audio_embed.dtype).itemsize
    t_bytes = jnp.dtype(text_embed.dtype).itemsize
    mm_bytes = jnp.dtype(mxu_dtype).itemsize
    footprint = (D * B * mm_bytes
                 + 2 * block_rows * D * (a_bytes + t_bytes)
                 + 3 * block_rows * B * 4
                 + 8 * B * 4)
    vmem_limit = int(min(max(footprint * 3 // 2 + (4 << 20), 32 << 20), 128 << 20))

    tile_out = jax.ShapeDtypeStruct((n_tiles, 1, B), jnp.float32)
    scal_out = jax.ShapeDtypeStruct((n_tiles, 1, 1), jnp.float32)
    col_spec = pl.BlockSpec((1, 1, B), lambda i: (i, 0, 0))
    scal_spec = pl.BlockSpec((1, 1, 1), lambda i: (i, 0, 0))

    outs = pl.pallas_call(
        _atc_partials_kernel,
        grid=(n_tiles,),
        in_specs=[
            pl.BlockSpec(memory_space=pltpu.SMEM),                      # log(1/T) scalar
            pl.BlockSpec((block_rows, D), lambda i: (i, 0)),            # audio row tile
            pl.BlockSpec((block_rows, D), lambda i: (i, 0)),            # matching text rows
            pl.BlockSpec((D, B), lambda i: (0, 0),
                         pipeline_mode=pl.Buffered(1)),                 # resident text^T
        ],
        out_specs=(col_spec, col_spec,
                   scal_spec, scal_spec, scal_spec, scal_spec, scal_spec, scal_spec),
        out_shape=(tile_out, tile_out,
                   scal_out, scal_out, scal_out, scal_out, scal_out, scal_out),
        compiler_params=pltpu.CompilerParams(
            # Tiles are independent (per-tile partial outputs) -> megacore-shardable on v7x.
            dimension_semantics=("parallel",),
            vmem_limit_bytes=vmem_limit,
        ),
    )(temp, audio_embed, text_embed, text_t)

    cmax_p, csum_p, rlse_p, diag_p, absa_p, sqa_p, abst_p, sqt_p = outs

    # Tiny O(n_tiles * B) merge in plain JAX: column logsumexp across row tiles.
    cmax_p = cmax_p[:, 0, :]                                            # (n_tiles, B)
    csum_p = csum_p[:, 0, :]
    col_max = jnp.max(cmax_p, axis=0)                                   # (B,)
    col_sum = jnp.sum(csum_p * jnp.exp(cmax_p - col_max[None, :]), axis=0)
    col_lse_sum = jnp.sum(col_max + jnp.log(col_sum))

    b_f = jnp.float32(B)
    loss = (0.5 / b_f) * (jnp.sum(rlse_p) + col_lse_sum - 2.0 * jnp.sum(diag_p))
    # Embedding regularization: mean(|x|) / sqrt(sum(x^2)).
    loss = loss + (jnp.sum(absa_p) / (b_f * D)) * lax.rsqrt(jnp.sum(sqa_p))
    loss = loss + (jnp.sum(abst_p) / (b_f * D)) * lax.rsqrt(jnp.sum(sqt_p))
    return loss


def _reference_loss(audio_embed, text_embed, log_inv_temp):
    """Pure-JAX reference matching the PyTorch module semantics (exact f32 matmuls)."""
    a = audio_embed.astype(jnp.float32)
    t = text_embed.astype(jnp.float32)
    scale = jnp.exp(log_inv_temp)
    sim_a2t = scale * jnp.matmul(a, t.T, precision=lax.Precision.HIGHEST)
    sim_t2a = scale * jnp.matmul(t, a.T, precision=lax.Precision.HIGHEST)
    eye = jnp.eye(a.shape[0], dtype=jnp.float32)
    loss_a2t = -jnp.mean(jnp.sum(jax.nn.log_softmax(sim_a2t, axis=1) * eye, axis=1))
    loss_t2a = -jnp.mean(jnp.sum(jax.nn.log_softmax(sim_t2a, axis=1) * eye, axis=1))
    loss = 0.5 * (loss_a2t + loss_t2a)
    loss = loss + jnp.mean(jnp.abs(a)) / jnp.sqrt(jnp.sum(a ** 2))
    loss = loss + jnp.mean(jnp.abs(t)) / jnp.sqrt(jnp.sum(t ** 2))
    return loss


if __name__ == "__main__":
    temperature = 0.07
    log_inv_temp = jnp.log(jnp.float32(1.0 / temperature))

    def _make(key, b, d):
        ka, kt = jax.random.split(key)
        a = jax.random.normal(ka, (b, d), dtype=jnp.float32)
        t = jax.random.normal(kt, (b, d), dtype=jnp.float32)
        # L2-normalized embeddings (the typical inputs of a contrastive loss) keep the
        # bf16-operand fast path well conditioned; the wrapper itself does not normalize.
        a = a / jnp.linalg.norm(a, axis=1, keepdims=True)
        t = t / jnp.linalg.norm(t, axis=1, keepdims=True)
        return a, t

    # Small single-tile case: batch of 8 paired audio/text embeddings, dim 32.
    a1, t1 = _make(jax.random.PRNGKey(0), 8, 32)
    loss1 = jax.block_until_ready(audio_text_contrastive_loss(a1, t1, log_inv_temp))
    ref1 = _reference_loss(a1, t1, log_inv_temp)
    assert jnp.allclose(loss1, ref1, rtol=2e-2, atol=2e-2), (loss1, ref1)

    # Multi-tile case exercising the parallel grid and the cross-tile column-LSE merge.
    a2, t2 = _make(jax.random.PRNGKey(1), 256, 128)
    loss2 = jax.block_until_ready(
        audio_text_contrastive_loss(a2, t2, log_inv_temp, block_rows=128))
    ref2 = _reference_loss(a2, t2, log_inv_temp)
    assert jnp.allclose(loss2, ref2, rtol=2e-2, atol=2e-2), (loss2, ref2)

    print("KERNEL_OK")
</pallas_src>

<mosaic_0001>
module attributes {stable_mosaic.version = 11 : i64} {
  func.func @_atc_partials_kernel(%arg0: i32, %arg1: memref<1xf32, #tpu.memory_space<smem>>, %arg2: memref<8x32xf32, #tpu.memory_space<vmem>>, %arg3: memref<8x32xf32, #tpu.memory_space<vmem>>, %arg4: memref<32x8xbf16, #tpu.memory_space<vmem>>, %arg5: memref<1x1x8xf32, #tpu.memory_space<vmem>>, %arg6: memref<1x1x8xf32, #tpu.memory_space<vmem>>, %arg7: memref<1x1x1xf32, #tpu.memory_space<vmem>>, %arg8: memref<1x1x1xf32, #tpu.memory_space<vmem>>, %arg9: memref<1x1x1xf32, #tpu.memory_space<vmem>>, %arg10: memref<1x1x1xf32, #tpu.memory_space<vmem>>, %arg11: memref<1x1x1xf32, #tpu.memory_space<vmem>>, %arg12: memref<1x1x1xf32, #tpu.memory_space<vmem>>) attributes {dimension_semantics = [#tpu.dimension_semantics<parallel>], iteration_bounds = array<i64: 1>, scalar_prefetch = 0 : i64, scratch_operands = 0 : i64, tpu.core_type = #tpu.core_type<tc>, window_params = [{transform_indices = @transform_0, window_bounds = array<i64: 1>}, {transform_indices = @transform_1, window_bounds = array<i64: 8, 32>}, {transform_indices = @transform_2, window_bounds = array<i64: 8, 32>}, {pipeline_mode = #tpu.pipeline_mode<synchronous>, transform_indices = @transform_3, window_bounds = array<i64: 32, 8>}, {transform_indices = @transform_4, window_bounds = array<i64: 1, 1, 8>}, {transform_indices = @transform_5, window_bounds = array<i64: 1, 1, 8>}, {transform_indices = @transform_6, window_bounds = array<i64: 1, 1, 1>}, {transform_indices = @transform_7, window_bounds = array<i64: 1, 1, 1>}, {transform_indices = @transform_8, window_bounds = array<i64: 1, 1, 1>}, {transform_indices = @transform_9, window_bounds = array<i64: 1, 1, 1>}, {transform_indices = @transform_10, window_bounds = array<i64: 1, 1, 1>}, {transform_indices = @transform_11, window_bounds = array<i64: 1, 1, 1>}]} {
    %c0 = arith.constant 0 : index
    %0 = memref.load %arg1[%c0] : memref<1xf32, #tpu.memory_space<smem>>
    %1 = math.exp %0 : f32
    %c0_0 = arith.constant 0 : index
    %c0_1 = arith.constant 0 : index
    %2 = vector.load %arg2[%c0_0, %c0_1] : memref<8x32xf32, #tpu.memory_space<vmem>>, vector<8x32xf32>
    %c0_2 = arith.constant 0 : index
    %c0_3 = arith.constant 0 : index
    %3 = vector.load %arg3[%c0_2, %c0_3] : memref<8x32xf32, #tpu.memory_space<vmem>>, vector<8x32xf32>
    %c0_4 = arith.constant 0 : index
    %c0_5 = arith.constant 0 : index
    %4 = vector.load %arg4[%c0_4, %c0_5] : memref<32x8xbf16, #tpu.memory_space<vmem>>, vector<32x8xbf16>
    %5 = arith.truncf %2 : vector<8x32xf32> to vector<8x32xbf16>
    %cst = arith.constant dense<0.000000e+00> : vector<8x8xf32>
    %6 = tpu.matmul %5, %4, %cst {dimension_numbers = #tpu.dot_dimension_numbers<[1], [0], [0], [1], [0, 0, 1, 1], [], []>} : vector<8x32xbf16>, vector<32x8xbf16>, vector<8x8xf32> -> vector<8x8xf32>
    %7 = vector.broadcast %1 : f32 to vector<8x8xf32>
    %8 = arith.mulf %7, %6 : vector<8x8xf32>
    %9 = arith.mulf %2, %3 : vector<8x32xf32>
    %cst_6 = arith.constant dense<0.000000e+00> : vector<8xf32>
    %10 = vector.multi_reduction <add>, %9, %cst_6 [1] : vector<8x32xf32> to vector<8xf32>
    %11 = vector.shape_cast %10 : vector<8xf32> to vector<8x1xf32>
    %12 = vector.broadcast %1 : f32 to vector<8x1xf32>
    %13 = arith.mulf %12, %11 : vector<8x1xf32>
    %cst_7 = arith.constant dense<0xFF800000> : vector<8xf32>
    %14 = vector.multi_reduction <maximumf>, %8, %cst_7 [1] : vector<8x8xf32> to vector<8xf32>
    %15 = vector.shape_cast %14 : vector<8xf32> to vector<8x1xf32>
    %16 = vector.broadcast %15 : vector<8x1xf32> to vector<8x8xf32>
    %17 = arith.subf %8, %16 : vector<8x8xf32>
    %18 = math.exp %17 : vector<8x8xf32>
    %cst_8 = arith.constant dense<0.000000e+00> : vector<8xf32>
    %19 = vector.multi_reduction <add>, %18, %cst_8 [1] : vector<8x8xf32> to vector<8xf32>
    %20 = vector.shape_cast %19 : vector<8xf32> to vector<8x1xf32>
    %21 = math.log %20 : vector<8x1xf32>
    %22 = arith.addf %15, %21 : vector<8x1xf32>
    %cst_9 = arith.constant dense<0xFF800000> : vector<8xf32>
    %23 = vector.multi_reduction <maximumf>, %8, %cst_9 [0] : vector<8x8xf32> to vector<8xf32>
    %24 = vector.shape_cast %23 : vector<8xf32> to vector<1x8xf32>
    %25 = vector.broadcast %24 : vector<1x8xf32> to vector<8x8xf32>
    %26 = arith.subf %8, %25 : vector<8x8xf32>
    %27 = math.exp %26 : vector<8x8xf32>
    %cst_10 = arith.constant dense<0.000000e+00> : vector<8xf32>
    %28 = vector.multi_reduction <add>, %27, %cst_10 [0] : vector<8x8xf32> to vector<8xf32>
    %29 = vector.shape_cast %28 : vector<8xf32> to vector<1x8xf32>
    %30 = vector.shape_cast %24 : vector<1x8xf32> to vector<1x1x8xf32>
    %c0_11 = arith.constant 0 : index
    %c0_12 = arith.constant 0 : index
    %c0_13 = arith.constant 0 : index
    %31 = vector.load %arg5[%c0_11, %c0_12, %c0_13] : memref<1x1x8xf32, #tpu.memory_space<vmem>>, vector<1x1x8xf32>
    tpu.vector_store %arg5[%c0_11, %c0_12, %c0_13], %30 {strides = array<i32>} : memref<1x1x8xf32, #tpu.memory_space<vmem>>, vector<1x1x8xf32>,
    %32 = vector.shape_cast %29 : vector<1x8xf32> to vector<1x1x8xf32>
    %c0_14 = arith.constant 0 : index
    %c0_15 = arith.constant 0 : index
    %c0_16 = arith.constant 0 : index
    %33 = vector.load %arg6[%c0_14, %c0_15, %c0_16] : memref<1x1x8xf32, #tpu.memory_space<vmem>>, vector<1x1x8xf32>
    tpu.vector_store %arg6[%c0_14, %c0_15, %c0_16], %32 {strides = array<i32>} : memref<1x1x8xf32, #tpu.memory_space<vmem>>, vector<1x1x8xf32>,
    %34 = vector.shape_cast %22 : vector<8x1xf32> to vector<1x8x1xf32>
    %cst_17 = arith.constant dense<0.000000e+00> : vector<1xf32>
    %35 = vector.multi_reduction <add>, %34, %cst_17 [1, 2] : vector<1x8x1xf32> to vector<1xf32>
    %36 = vector.shape_cast %35 : vector<1xf32> to vector<1x1x1xf32>
    %37 = vector.extract %36[0, 0, 0] : f32 from vector<1x1x1xf32>
    %38 = vector.broadcast %37 : f32 to vector<1x1xf32>
    %39 = vector.shape_cast %38 : vector<1x1xf32> to vector<1x1x1xf32>
    %c0_18 = arith.constant 0 : index
    %c0_19 = arith.constant 0 : index
    %c0_20 = arith.constant 0 : index
    %40 = vector.load %arg7[%c0_18, %c0_19, %c0_20] : memref<1x1x1xf32, #tpu.memory_space<vmem>>, vector<1x1x1xf32>
    tpu.vector_store %arg7[%c0_18, %c0_19, %c0_20], %39 {strides = array<i32>} : memref<1x1x1xf32, #tpu.memory_space<vmem>>, vector<1x1x1xf32>,
    %41 = vector.shape_cast %13 : vector<8x1xf32> to vector<1x8x1xf32>
    %cst_21 = arith.constant dense<0.000000e+00> : vector<1xf32>
    %42 = vector.multi_reduction <add>, %41, %cst_21 [1, 2] : vector<1x8x1xf32> to vector<1xf32>
    %43 = vector.shape_cast %42 : vector<1xf32> to vector<1x1x1xf32>
    %44 = vector.extract %43[0, 0, 0] : f32 from vector<1x1x1xf32>
    %45 = vector.broadcast %44 : f32 to vector<1x1xf32>
    %46 = vector.shape_cast %45 : vector<1x1xf32> to vector<1x1x1xf32>
    %c0_22 = arith.constant 0 : index
    %c0_23 = arith.constant 0 : index
    %c0_24 = arith.constant 0 : index
    %47 = vector.load %arg8[%c0_22, %c0_23, %c0_24] : memref<1x1x1xf32, #tpu.memory_space<vmem>>, vector<1x1x1xf32>
    tpu.vector_store %arg8[%c0_22, %c0_23, %c0_24], %46 {strides = array<i32>} : memref<1x1x1xf32, #tpu.memory_space<vmem>>, vector<1x1x1xf32>,
    %48 = math.absf %2 : vector<8x32xf32>
    %49 = vector.shape_cast %48 : vector<8x32xf32> to vector<1x8x32xf32>
    %cst_25 = arith.constant dense<0.000000e+00> : vector<1xf32>
    %50 = vector.multi_reduction <add>, %49, %cst_25 [1, 2] : vector<1x8x32xf32> to vector<1xf32>
    %51 = vector.shape_cast %50 : vector<1xf32> to vector<1x1x1xf32>
    %52 = vector.extract %51[0, 0, 0] : f32 from vector<1x1x1xf32>
    %53 = vector.broadcast %52 : f32 to vector<1x1xf32>
    %54 = vector.shape_cast %53 : vector<1x1xf32> to vector<1x1x1xf32>
    %c0_26 = arith.constant 0 : index
    %c0_27 = arith.constant 0 : index
    %c0_28 = arith.constant 0 : index
    %55 = vector.load %arg9[%c0_26, %c0_27, %c0_28] : memref<1x1x1xf32, #tpu.memory_space<vmem>>, vector<1x1x1xf32>
    tpu.vector_store %arg9[%c0_26, %c0_27, %c0_28], %54 {strides = array<i32>} : memref<1x1x1xf32, #tpu.memory_space<vmem>>, vector<1x1x1xf32>,
    %56 = arith.mulf %2, %2 : vector<8x32xf32>
    %57 = vector.shape_cast %56 : vector<8x32xf32> to vector<1x8x32xf32>
    %cst_29 = arith.constant dense<0.000000e+00> : vector<1xf32>
    %58 = vector.multi_reduction <add>, %57, %cst_29 [1, 2] : vector<1x8x32xf32> to vector<1xf32>
    %59 = vector.shape_cast %58 : vector<1xf32> to vector<1x1x1xf32>
    %60 = vector.extract %59[0, 0, 0] : f32 from vector<1x1x1xf32>
    %61 = vector.broadcast %60 : f32 to vector<1x1xf32>
    %62 = vector.shape_cast %61 : vector<1x1xf32> to vector<1x1x1xf32>
    %c0_30 = arith.constant 0 : index
    %c0_31 = arith.constant 0 : index
    %c0_32 = arith.constant 0 : index
    %63 = vector.load %arg10[%c0_30, %c0_31, %c0_32] : memref<1x1x1xf32, #tpu.memory_space<vmem>>, vector<1x1x1xf32>
    tpu.vector_store %arg10[%c0_30, %c0_31, %c0_32], %62 {strides = array<i32>} : memref<1x1x1xf32, #tpu.memory_space<vmem>>, vector<1x1x1xf32>,
    %64 = math.absf %3 : vector<8x32xf32>
    %65 = vector.shape_cast %64 : vector<8x32xf32> to vector<1x8x32xf32>
    %cst_33 = arith.constant dense<0.000000e+00> : vector<1xf32>
    %66 = vector.multi_reduction <add>, %65, %cst_33 [1, 2] : vector<1x8x32xf32> to vector<1xf32>
    %67 = vector.shape_cast %66 : vector<1xf32> to vector<1x1x1xf32>
    %68 = vector.extract %67[0, 0, 0] : f32 from vector<1x1x1xf32>
    %69 = vector.broadcast %68 : f32 to vector<1x1xf32>
    %70 = vector.shape_cast %69 : vector<1x1xf32> to vector<1x1x1xf32>
    %c0_34 = arith.constant 0 : index
    %c0_35 = arith.constant 0 : index
    %c0_36 = arith.constant 0 : index
    %71 = vector.load %arg11[%c0_34, %c0_35, %c0_36] : memref<1x1x1xf32, #tpu.memory_space<vmem>>, vector<1x1x1xf32>
    tpu.vector_store %arg11[%c0_34, %c0_35, %c0_36], %70 {strides = array<i32>} : memref<1x1x1xf32, #tpu.memory_space<vmem>>, vector<1x1x1xf32>,
    %72 = arith.mulf %3, %3 : vector<8x32xf32>
    %73 = vector.shape_cast %72 : vector<8x32xf32> to vector<1x8x32xf32>
    %cst_37 = arith.constant dense<0.000000e+00> : vector<1xf32>
    %74 = vector.multi_reduction <add>, %73, %cst_37 [1, 2] : vector<1x8x32xf32> to vector<1xf32>
    %75 = vector.shape_cast %74 : vector<1xf32> to vector<1x1x1xf32>
    %76 = vector.extract %75[0, 0, 0] : f32 from vector<1x1x1xf32>
    %77 = vector.broadcast %76 : f32 to vector<1x1xf32>
    %78 = vector.shape_cast %77 : vector<1x1xf32> to vector<1x1x1xf32>
    %c0_38 = arith.constant 0 : index
    %c0_39 = arith.constant 0 : index
    %c0_40 = arith.constant 0 : index
    %79 = vector.load %arg12[%c0_38, %c0_39, %c0_40] : memref<1x1x1xf32, #tpu.memory_space<vmem>>, vector<1x1x1xf32>
    tpu.vector_store %arg12[%c0_38, %c0_39, %c0_40], %78 {strides = array<i32>} : memref<1x1x1xf32, #tpu.memory_space<vmem>>, vector<1x1x1xf32>,
    return
  }
  func.func @transform_0(%arg0: i32) -> i32 {
    %c0_i32 = arith.constant 0 : i32
    %c0_i32_0 = arith.constant 0 : i32
    return %c0_i32 : i32
  }
  func.func @transform_1(%arg0: i32) -> (i32, i32) {
    %c0_i32 = arith.constant 0 : i32
    %c0_i32_0 = arith.constant 0 : i32
    return %arg0, %c0_i32 : i32, i32
  }
  func.func @transform_2(%arg0: i32) -> (i32, i32) {
    %c0_i32 = arith.constant 0 : i32
    %c0_i32_0 = arith.constant 0 : i32
    return %arg0, %c0_i32 : i32, i32
  }
  func.func @transform_3(%arg0: i32) -> (i32, i32) {
    %c0_i32 = arith.constant 0 : i32
    %c0_i32_0 = arith.constant 0 : i32
    %c0_i32_1 = arith.constant 0 : i32
    return %c0_i32, %c0_i32_0 : i32, i32
  }
  func.func @transform_4(%arg0: i32) -> (i32, i32, i32) {
    %c0_i32 = arith.constant 0 : i32
    %c0_i32_0 = arith.constant 0 : i32
    %c0_i32_1 = arith.constant 0 : i32
    return %arg0, %c0_i32, %c0_i32_0 : i32, i32, i32
  }
  func.func @transform_5(%arg0: i32) -> (i32, i32, i32) {
    %c0_i32 = arith.constant 0 : i32
    %c0_i32_0 = arith.constant 0 : i32
    %c0_i32_1 = arith.constant 0 : i32
    return %arg0, %c0_i32, %c0_i32_0 : i32, i32, i32
  }
  func.func @transform_6(%arg0: i32) -> (i32, i32, i32) {
    %c0_i32 = arith.constant 0 : i32
    %c0_i32_0 = arith.constant 0 : i32
    %c0_i32_1 = arith.constant 0 : i32
    return %arg0, %c0_i32, %c0_i32_0 : i32, i32, i32
  }
  func.func @transform_7(%arg0: i32) -> (i32, i32, i32) {
    %c0_i32 = arith.constant 0 : i32
    %c0_i32_0 = arith.constant 0 : i32
    %c0_i32_1 = arith.constant 0 : i32
    return %arg0, %c0_i32, %c0_i32_0 : i32, i32, i32
  }
  func.func @transform_8(%arg0: i32) -> (i32, i32, i32) {
    %c0_i32 = arith.constant 0 : i32
    %c0_i32_0 = arith.constant 0 : i32
    %c0_i32_1 = arith.constant 0 : i32
    return %arg0, %c0_i32, %c0_i32_0 : i32, i32, i32
  }
  func.func @transform_9(%arg0: i32) -> (i32, i32, i32) {
    %c0_i32 = arith.constant 0 : i32
    %c0_i32_0 = arith.constant 0 : i32
    %c0_i32_1 = arith.constant 0 : i32
    return %arg0, %c0_i32, %c0_i32_0 : i32, i32, i32
  }
  func.func @transform_10(%arg0: i32) -> (i32, i32, i32) {
    %c0_i32 = arith.constant 0 : i32
    %c0_i32_0 = arith.constant 0 : i32
    %c0_i32_1 = arith.constant 0 : i32
    return %arg0, %c0_i32, %c0_i32_0 : i32, i32, i32
  }
  func.func @transform_11(%arg0: i32) -> (i32, i32, i32) {
    %c0_i32 = arith.constant 0 : i32
    %c0_i32_0 = arith.constant 0 : i32
    %c0_i32_1 = arith.constant 0 : i32
    return %arg0, %c0_i32, %c0_i32_0 : i32, i32, i32
  }
}

</mosaic_0001>

<llo_original>
// kernel: tpu_custom_call.1
$region0: #{tpu_custom_call.1}
  #allocation0 [shape = 'u32[]', space=smem, size = 0x4, offset = 0x4, fixed_abs, tag = 'smem constant byte address 0x4 - core index']
  #allocation1 [shape = 'u32[144,128]{1,0:T(1,128)}', space=vmem, size = 0x12000, scoped, tag = 'internal scratch']
  #allocation2 [shape = 'f32[1]{0:T(128)S(6)}', space=smem, size = 0x200, scoped, tag = 'scoped memory for tpu_custom_call.1']
  %s0 = inlined_call_operand.<no memory space> [shape: f32[1], index: 0, kind: input, shape index: {}]
  %s1 = inlined_call_operand.vmem [shape: f32[8,32], index: 1, kind: input, shape index: {}]
  %s2 = inlined_call_operand.vmem [shape: f32[8,32], index: 2, kind: input, shape index: {}]
  %s3 = inlined_call_operand.vmem [shape: bf16[32,8], index: 3, kind: input, shape index: {}]
  %s4 = inlined_call_operand.hbm [shape: f32[1,1,8], index: 4, kind: output, shape index: {0}]
  %s5 = inlined_call_operand.hbm [shape: f32[1,1,8], index: 5, kind: output, shape index: {1}]
  %s6 = inlined_call_operand.hbm [shape: f32[1,1,1], index: 6, kind: output, shape index: {2}]
  %s7 = inlined_call_operand.hbm [shape: f32[1,1,1], index: 7, kind: output, shape index: {3}]
  %s8 = inlined_call_operand.hbm [shape: f32[1,1,1], index: 8, kind: output, shape index: {4}]
  %s9 = inlined_call_operand.hbm [shape: f32[1,1,1], index: 9, kind: output, shape index: {5}]
  %s10 = inlined_call_operand.hbm [shape: f32[1,1,1], index: 10, kind: output, shape index: {6}]
  %s11 = inlined_call_operand.hbm [shape: f32[1,1,1], index: 11, kind: output, shape index: {7}]
  %12 = xla_tuple %s4, %s5, %s6, %s7, %s8, %s9, %s10, %s11
  %s13 = sld [smem:[#allocation0]]
  $region82: #{tpu_custom_call.1} parent=0
    _
  %s15 = ssub.s32 1, %s13
  %s16 = scalar_select 0, %s15, %s13
  %17 = sst [smem:[#allocation2]] %s0
  $region1: #{tpu_custom_call.1} parent=0
    #allocation3 [shape = 'u8[512]{0}', space=vmem, size = 0x400, scoped, tag = 'output window, operand 0, single buffered']
    #allocation4 [shape = 's32[1]{0}', space=sflag, size = 0x4, scoped, tag = 'scoped memory for tpu_custom_call.1']
    #allocation5 [shape = 'u8[512]{0}', space=vmem, size = 0x400, scoped, tag = 'output window, operand 1, single buffered']
    #allocation6 [shape = 's32[1]{0}', space=sflag, size = 0x4, scoped, tag = 'scoped memory for tpu_custom_call.1']
    #allocation7 [shape = 'u8[512]{0}', space=vmem, size = 0x400, scoped, tag = 'output window, operand 2, single buffered']
    #allocation8 [shape = 'u8[512]{0}', space=vmem, size = 0x400, scoped, tag = 'output window, operand 3, single buffered']
    #allocation9 [shape = 's32[1]{0}', space=sflag, size = 0x4, scoped, tag = 'scoped memory for tpu_custom_call.1']
    #allocation10 [shape = 'u8[512]{0}', space=vmem, size = 0x400, scoped, tag = 'output window, operand 4, single buffered']
    #allocation11 [shape = 'u8[512]{0}', space=vmem, size = 0x400, scoped, tag = 'output window, operand 5, single buffered']
    #allocation12 [shape = 's32[1]{0}', space=sflag, size = 0x4, scoped, tag = 'scoped memory for tpu_custom_call.1']
    #allocation13 [shape = 'u8[512]{0}', space=vmem, size = 0x400, scoped, tag = 'output window, operand 6, single buffered']
    #allocation14 [shape = 'u8[512]{0}', space=vmem, size = 0x400, scoped, tag = 'output window, operand 7, single buffered']
    #allocation15 [shape = 's32[1]{0}', space=sflag, size = 0x4, scoped, tag = 'scoped memory for tpu_custom_call.1']
    %18 = vsyncpa [#allocation4], 0
    %19 = vsyncpa [#allocation6], 0
    %20 = vsyncpa [#allocation9], 0
    %21 = vsyncpa [#allocation12], 0
    %22 = vsyncpa [#allocation15], 0
    // Predicated region
    $region2: #{tpu_custom_call.1} parent=1 // pred_check
      _
    $region3: #{tpu_custom_call.1} parent=1 // pred_check_branch
      %24 = sbr.rel (0) target = $region5
    $region4: #{tpu_custom_call.1} parent=1 // pred_region
      _
    $region5: #{tpu_custom_call.1} parent=1 // pred_fallthru
      _
    // Predicated region
    $region6: #{tpu_custom_call.1} parent=1 // pred_check
      _
    $region7: #{tpu_custom_call.1} parent=1 // pred_check_branch
      %26 = sbr.rel (0) target = $region9
    $region8: #{tpu_custom_call.1} parent=1 // pred_region
      _
    $region9: #{tpu_custom_call.1} parent=1 // pred_fallthru
      _
    // Predicated region
    $region10: #{tpu_custom_call.1} parent=1 // pred_check
      _
    $region11: #{tpu_custom_call.1} parent=1 // pred_check_branch
      %28 = sbr.rel (0) target = $region13
    $region12: #{tpu_custom_call.1} parent=1 // pred_region
      _
    $region13: #{tpu_custom_call.1} parent=1 // pred_fallthru
      _
    // Predicated region
    $region14: #{tpu_custom_call.1} parent=1 // pred_check
      _
    $region15: #{tpu_custom_call.1} parent=1 // pred_check_branch
      %30 = sbr.rel (0) target = $region17
    $region16: #{tpu_custom_call.1} parent=1 // pred_region
      _
    $region17: #{tpu_custom_call.1} parent=1 // pred_fallthru
      _
    %s32 = sld [smem:[#allocation2]]
    %v33 = vstv %s32
    %v34 = vmul.f32 %v33, 1.442695
    %v35 = vpow.pop %v34
    %s36 = vtos %v35
    %v37 = vld [vmem:[%s1] sm:$0xff]
    %v38 = vld [vmem:[%s2] sm:$0xff]
    %v39 = vld [vmem:[%s3] sm:$0xf]
    %v40 = vld [vmem:[%s3 + $0x4] sm:$0xf]
    %v41 = vld [vmem:[%s3 + $0x8] sm:$0xf]
    %v42 = vld [vmem:[%s3 + $0xc] sm:$0xf]
    %v43 = vpack.c.bf16 %v37, %v37
    %v48 = vunpack.c.l.b16 %v39
    %v49 = vunpack.c.l.b16 %v40
    %v50 = vunpack.c.l.b16 %v41
    %v51 = vunpack.c.l.b16 %v42
    %v52 = vpack.c.b16 %v49, %v48
    %v53 = vpack.c.b16 %v51, %v50
    %vm56 = vcmask 261120
    %v58 = vsel %vm56, %v43, 0
    %60 = vmatprep.subr.bf16.mxu0 0
    %61 = vmatpush1.bf16.msra.mxu0 %v52
    %62 = vmatprep.subr.bf16.mxu0 0
    %63 = vmatpush1.bf16.msra.mxu0 %v53
    %64 = vmatprep.subr.bf16.mxu0 0
    %65 = vmatpush1.bf16.msra.mxu0 0
    %66 = vmatprep.subr.bf16.mxu0 0
    %67 = vmatpush1.bf16.msra.mxu0 0
    %68 = vmatprep.subr.bf16.mxu0 0
    %69 = vmatpush1.bf16.msra.mxu0 0
    %70 = vmatprep.subr.bf16.mxu0 0
    %71 = vmatpush1.bf16.msra.mxu0 0
    %72 = vmatprep.subr.bf16.mxu0 0
    %73 = vmatpush1.bf16.msra.mxu0 0
    %74 = vmatprep.subr.bf16.mxu0 0
    %75 = vmatpush1.bf16.msra.mxu0 0
    %76 = vmatprep.subr.bf16.mxu0 0
    %77 = vmatpush1.bf16.msra.mxu0 0
    %78 = vmatprep.subr.bf16.mxu0 0
    %79 = vmatpush1.bf16.msra.mxu0 0
    %80 = vmatprep.subr.bf16.mxu0 0
    %81 = vmatpush1.bf16.msra.mxu0 0
    %82 = vmatprep.subr.bf16.mxu0 0
    %83 = vmatpush1.bf16.msra.mxu0 0
    %84 = vmatprep.subr.bf16.mxu0 0
    %85 = vmatpush1.bf16.msra.mxu0 0
    %86 = vmatprep.subr.bf16.mxu0 0
    %87 = vmatpush1.bf16.msra.mxu0 0
    %88 = vmatprep.subr.bf16.mxu0 0
    %89 = vmatpush1.bf16.msra.mxu0 0
    %90 = vmatprep.subr.bf16.mxu0 0
    %91 = vmatpush1.bf16.msra.mxu0 0
    %92 = vmatprep.mubr.bf16.mxu0 0
    %93 = vmatmul.mubr.bf16.gmra.mrb[0].mxu0 %v58
    %v94 = vpop.f32.mrb[0].mxu0
    %v95 = vadd.f32 0.0, %v94
    %v96 = vpop.f32.mrb[0].mxu0
    %v97 = vpop.f32.mrb[0].mxu0
    %v98 = vpop.f32.mrb[0].mxu0
    %99 = vdwg.mxu0
    %v100 = vstv %s36
    %v101 = vmul.f32 %v100, %v95
    %v102 = vmul.f32 %v37, %v38
    %v103 = vsel %vm56, %v102, 0.0
    %104 = vadd.xlane.f32.xlu0 %v103
    %v105 = vpop.xlane.xlu0 %104
    %v106 = vmul.f32 %v100, %v105
    %vm107 = vcmask 64512
    %v108 = vsel %vm107, %v101, -inf
    %109 = vmax.xlane.f32.xlu0 %v108
    %v110 = vpop.xlane.xlu0 %109
    %v111 = vsub.f32 %v101, %v110
    %v112 = vmul.f32 %v111, 1.442695
    %v113 = vpow.pop %v112
    %v114 = vsel %vm107, %v113, 0.0
    %115 = vadd.xlane.f32.xlu0 %v114
    %v116 = vpop.xlane.xlu0 %115
    %v117 = vlog2.pop %v116
    %v118 = vmul.f32 %v117, 0.6931472
    %v119 = vadd.f32 %v110, %v118
    %v120 = vrot.slane %v108, 4
    %v121 = vmax.f32 %v108, %v120
    %v122 = vrot.slane %v121, 2
    %v123 = vmax.f32 %v121, %v122
    %v124 = vrot.slane %v123, 1
    %v125 = vmax.f32 %v123, %v124
    %v126 = vsub.f32 %v101, %v125
    %v127 = vmul.f32 %v126, 1.442695
    %v128 = vpow.pop %v127
    %v129 = vsel %vm107, %v128, 0.0
    %v130 = vrot.slane %v129, 4
    %v131 = vadd.f32 %v129, %v130
    %v132 = vrot.slane %v131, 2
    %v133 = vadd.f32 %v131, %v132
    %v134 = vrot.slane %v133, 1
    %v135 = vadd.f32 %v133, %v134
    %vm136 = vcmask 57344
    %137 = vst.msk [vmem:[#allocation3] sm:$0x1] %vm136, %v125
    %138 = vst.msk [vmem:[#allocation5] sm:$0x1] %vm136, %v135
    %vm139 = vcmask 7168
    %v140 = vsel %vm139, %v119, 0.0
    %141 = vadd.xlane.f32.xlu0 %v140
    %v142 = vpop.xlane.xlu0 %141
    %v143 = vrot.slane %v142, 4
    %v144 = vadd.f32 %v142, %v143
    %v145 = vrot.slane %v144, 2
    %v146 = vadd.f32 %v144, %v145
    %v147 = vrot.slane %v146, 1
    %v148 = vadd.f32 %v146, %v147
    %s149 = vtos %v148
    %v150 = vstv %s149
    %vm151 = vcmask 0
    %152 = vst.msk [vmem:[#allocation7] sm:$0x1] %vm151, %v150
    %v153 = vsel %vm139, %v106, 0.0
    %154 = vadd.xlane.f32.xlu0 %v153
    %v155 = vpop.xlane.xlu0 %154
    %v156 = vrot.slane %v155, 4
    %v157 = vadd.f32 %v155, %v156
    %v158 = vrot.slane %v157, 2
    %v159 = vadd.f32 %v157, %v158
    %v160 = vrot.slane %v159, 1
    %v161 = vadd.f32 %v159, %v160
    %s162 = vtos %v161
    %v163 = vstv %s162
    %164 = vst.msk [vmem:[#allocation8] sm:$0x1] %vm151, %v163
    %v165 = vand.u32 2147483647, %v37
    %v166 = vsel %vm56, %v165, 0.0
    %167 = vadd.xlane.f32.xlu0 %v166
    %v168 = vpop.xlane.xlu0 %167
    %v169 = vrot.slane %v168, 4
    %v170 = vadd.f32 %v168, %v169
    %v171 = vrot.slane %v170, 2
    %v172 = vadd.f32 %v170, %v171
    %v173 = vrot.slane %v172, 1
    %v174 = vadd.f32 %v172, %v173
    %s175 = vtos %v174
    %v176 = vstv %s175
    %177 = vst.msk [vmem:[#allocation10] sm:$0x1] %vm151, %v176
    %v178 = vmul.f32 %v37, %v37
    %v179 = vsel %vm56, %v178, 0.0
    %180 = vadd.xlane.f32.xlu0 %v179
    %v181 = vpop.xlane.xlu0 %180
    %v182 = vrot.slane %v181, 4
    %v183 = vadd.f32 %v181, %v182
    %v184 = vrot.slane %v183, 2
    %v185 = vadd.f32 %v183, %v184
    %v186 = vrot.slane %v185, 1
    %v187 = vadd.f32 %v185, %v186
    %s188 = vtos %v187
    %v189 = vstv %s188
    %190 = vst.msk [vmem:[#allocation11] sm:$0x1] %vm151, %v189
    %v191 = vand.u32 2147483647, %v38
    %v192 = vsel %vm56, %v191, 0.0
    %193 = vadd.xlane.f32.xlu0 %v192
    %v194 = vpop.xlane.xlu0 %193
    %v195 = vrot.slane %v194, 4
    %v196 = vadd.f32 %v194, %v195
    %v197 = vrot.slane %v196, 2
    %v198 = vadd.f32 %v196, %v197
    %v199 = vrot.slane %v198, 1
    %v200 = vadd.f32 %v198, %v199
    %s201 = vtos %v200
    %v202 = vstv %s201
    %203 = vst.msk [vmem:[#allocation13] sm:$0x1] %vm151, %v202
    %v204 = vmul.f32 %v38, %v38
    %v205 = vsel %vm56, %v204, 0.0
    %206 = vadd.xlane.f32.xlu0 %v205
    %v207 = vpop.xlane.xlu0 %206
    %v208 = vrot.slane %v207, 4
    %v209 = vadd.f32 %v207, %v208
    %v210 = vrot.slane %v209, 2
    %v211 = vadd.f32 %v209, %v210
    %v212 = vrot.slane %v211, 1
    %v213 = vadd.f32 %v211, %v212
    %s214 = vtos %v213
    %v215 = vstv %s214
    %216 = vst.msk [vmem:[#allocation14] sm:$0x1] %vm151, %v215
    // Predicated region
    $region18: #{tpu_custom_call.1} parent=1 // pred_check
      _
    $region19: #{tpu_custom_call.1} parent=1 // pred_check_branch
      %218 = sbr.rel (0) target = $region21
    $region20: #{tpu_custom_call.1} parent=1 // pred_region
      %s220 = ssub.s32 16, 16
      %221 = vsyncadd [#allocation4], %s220
      %s223 = sshll.u32 [#allocation3], 4
      %s224 = int_to_ptr.vmem [resolvable:$true] %s223
      %226 = dma.vmem_to_hbm [thread:$0]  %s224, 16, %s4, [#allocation4]
    $region21: #{tpu_custom_call.1} parent=1 // pred_fallthru
      _
    // Predicated region
    $region22: #{tpu_custom_call.1} parent=1 // pred_check
      _
    $region23: #{tpu_custom_call.1} parent=1 // pred_check_branch
      %228 = sbr.rel (0) target = $region25
    $region24: #{tpu_custom_call.1} parent=1 // pred_region
      %s230 = ssub.s32 16, 16
      %231 = vsyncadd [#allocation6], %s230
      %s233 = sshll.u32 [#allocation5], 4
      %s234 = int_to_ptr.vmem [resolvable:$true] %s233
      %236 = dma.vmem_to_hbm [thread:$0]  %s234, 16, %s5, [#allocation6]
    $region25: #{tpu_custom_call.1} parent=1 // pred_fallthru
      _
    // Predicated region
    $region26: #{tpu_custom_call.1} parent=1 // pred_check
      _
    $region27: #{tpu_custom_call.1} parent=1 // pred_check_branch
      %238 = sbr.rel (0) target = $region29
    $region28: #{tpu_custom_call.1} parent=1 // pred_region
      %s240 = ssub.s32 16, 16
      %241 = vsyncadd [#allocation6], %s240
      %s243 = sshll.u32 [#allocation7], 4
      %s244 = int_to_ptr.vmem [resolvable:$true] %s243
      %246 = dma.vmem_to_hbm [thread:$0]  %s244, 16, %s6, [#allocation6]
    $region29: #{tpu_custom_call.1} parent=1 // pred_fallthru
      _
    // Predicated region
    $region30: #{tpu_custom_call.1} parent=1 // pred_check
      _
    $region31: #{tpu_custom_call.1} parent=1 // pred_check_branch
      %248 = sbr.rel (0) target = $region33
    $region32: #{tpu_custom_call.1} parent=1 // pred_region
      %s250 = ssub.s32 16, 16
      %251 = vsyncadd [#allocation9], %s250
      %s253 = sshll.u32 [#allocation8], 4
      %s254 = int_to_ptr.vmem [resolvable:$true] %s253
      %256 = dma.vmem_to_hbm [thread:$0]  %s254, 16, %s7, [#allocation9]
    $region33: #{tpu_custom_call.1} parent=1 // pred_fallthru
      _
    // Predicated region
    $region34: #{tpu_custom_call.1} parent=1 // pred_check
      _
    $region35: #{tpu_custom_call.1} parent=1 // pred_check_branch
      %258 = sbr.rel (0) target = $region37
    $region36: #{tpu_custom_call.1} parent=1 // pred_region
      %s260 = ssub.s32 16, 16
      %261 = vsyncadd [#allocation9], %s260
      %s263 = sshll.u32 [#allocation10], 4
      %s264 = int_to_ptr.vmem [resolvable:$true] %s263
      %266 = dma.vmem_to_hbm [thread:$0]  %s264, 16, %s8, [#allocation9]
    $region37: #{tpu_custom_call.1} parent=1 // pred_fallthru
      _
    // Predicated region
    $region38: #{tpu_custom_call.1} parent=1 // pred_check
      _
    $region39: #{tpu_custom_call.1} parent=1 // pred_check_branch
      %268 = sbr.rel (0) target = $region41
    $region40: #{tpu_custom_call.1} parent=1 // pred_region
      %s270 = ssub.s32 16, 16
      %271 = vsyncadd [#allocation12], %s270
      %s273 = sshll.u32 [#allocation11], 4
      %s274 = int_to_ptr.vmem [resolvable:$true] %s273
      %276 = dma.vmem_to_hbm [thread:$0]  %s274, 16, %s9, [#allocation12]
    $region41: #{tpu_custom_call.1} parent=1 // pred_fallthru
      _
    // Predicated region
    $region42: #{tpu_custom_call.1} parent=1 // pred_check
      _
    $region43: #{tpu_custom_call.1} parent=1 // pred_check_branch
      %278 = sbr.rel (0) target = $region45
    $region44: #{tpu_custom_call.1} parent=1 // pred_region
      %s280 = ssub.s32 16, 16
      %281 = vsyncadd [#allocation12], %s280
      %s283 = sshll.u32 [#allocation13], 4
      %s284 = int_to_ptr.vmem [resolvable:$true] %s283
      %286 = dma.vmem_to_hbm [thread:$0]  %s284, 16, %s10, [#allocation12]
    $region45: #{tpu_custom_call.1} parent=1 // pred_fallthru
      _
    // Predicated region
    $region46: #{tpu_custom_call.1} parent=1 // pred_check
      _
    $region47: #{tpu_custom_call.1} parent=1 // pred_check_branch
      %288 = sbr.rel (0) target = $region49
    $region48: #{tpu_custom_call.1} parent=1 // pred_region
      %s290 = ssub.s32 16, 16
      %291 = vsyncadd [#allocation15], %s290
      %s293 = sshll.u32 [#allocation14], 4
      %s294 = int_to_ptr.vmem [resolvable:$true] %s293
      %296 = dma.vmem_to_hbm [thread:$0]  %s294, 16, %s11, [#allocation15]
    $region49: #{tpu_custom_call.1} parent=1 // pred_fallthru
      _
    // Predicated region
    $region50: #{tpu_custom_call.1} parent=1 // pred_check
      _
    $region51: #{tpu_custom_call.1} parent=1 // pred_check_branch
      %298 = sbr.rel (0) target = $region53
    $region52: #{tpu_custom_call.1} parent=1 // pred_region
      %299 = dma.done [#allocation4], 16
    $region53: #{tpu_custom_call.1} parent=1 // pred_fallthru
      _
    // Predicated region
    $region54: #{tpu_custom_call.1} parent=1 // pred_check
      _
    $region55: #{tpu_custom_call.1} parent=1 // pred_check_branch
      %301 = sbr.rel (0) target = $region57
    $region56: #{tpu_custom_call.1} parent=1 // pred_region
      %302 = dma.done [#allocation6], 16
    $region57: #{tpu_custom_call.1} parent=1 // pred_fallthru
      _
    // Predicated region
    $region58: #{tpu_custom_call.1} parent=1 // pred_check
      _
    $region59: #{tpu_custom_call.1} parent=1 // pred_check_branch
      %304 = sbr.rel (0) target = $region61
    $region60: #{tpu_custom_call.1} parent=1 // pred_region
      %305 = dma.done [#allocation6], 16
    $region61: #{tpu_custom_call.1} parent=1 // pred_fallthru
      _
    // Predicated region
    $region62: #{tpu_custom_call.1} parent=1 // pred_check
      _
    $region63: #{tpu_custom_call.1} parent=1 // pred_check_branch
      %307 = sbr.rel (0) target = $region65
    $region64: #{tpu_custom_call.1} parent=1 // pred_region
      %308 = dma.done [#allocation9], 16
    $region65: #{tpu_custom_call.1} parent=1 // pred_fallthru
      _
    // Predicated region
    $region66: #{tpu_custom_call.1} parent=1 // pred_check
      _
    $region67: #{tpu_custom_call.1} parent=1 // pred_check_branch
      %310 = sbr.rel (0) target = $region69
    $region68: #{tpu_custom_call.1} parent=1 // pred_region
      %311 = dma.done [#allocation9], 16
    $region69: #{tpu_custom_call.1} parent=1 // pred_fallthru
      _
    // Predicated region
    $region70: #{tpu_custom_call.1} parent=1 // pred_check
      _
    $region71: #{tpu_custom_call.1} parent=1 // pred_check_branch
      %313 = sbr.rel (0) target = $region73
    $region72: #{tpu_custom_call.1} parent=1 // pred_region
      %314 = dma.done [#allocation12], 16
    $region73: #{tpu_custom_call.1} parent=1 // pred_fallthru
      _
    // Predicated region
    $region74: #{tpu_custom_call.1} parent=1 // pred_check
      _
    $region75: #{tpu_custom_call.1} parent=1 // pred_check_branch
      %316 = sbr.rel (0) target = $region77
    $region76: #{tpu_custom_call.1} parent=1 // pred_region
      %317 = dma.done [#allocation12], 16
    $region77: #{tpu_custom_call.1} parent=1 // pred_fallthru
      _
    // Predicated region
    $region78: #{tpu_custom_call.1} parent=1 // pred_check
      _
    $region79: #{tpu_custom_call.1} parent=1 // pred_check_branch
      %319 = sbr.rel (0) target = $region81
    $region80: #{tpu_custom_call.1} parent=1 // pred_region
      %320 = dma.done [#allocation15], 16
    $region81: #{tpu_custom_call.1} parent=1 // pred_fallthru
      _
    %321 = vsyncpa [#allocation4], 1
    %322 = vsyncpa [#allocation6], 1
    %323 = vsyncpa [#allocation9], 1
    %324 = vsyncpa [#allocation12], 1
    %325 = vsyncpa [#allocation15], 1

</llo_original>
